<compile_context>
chip_gen: v7x
topology: tpu7x:2x2x1
jax: 0.10.0
libtpu: 0.0.40
codegen_flags: <defaults>
</compile_context>

<pallas_src>
import math

import jax
import jax.numpy as jnp
import numpy as np
from jax import lax
from jax.experimental import pallas as pl
from jax.experimental.pallas import tpu as pltpu

_LANE = 128
_EPS = 1e-5
_NEG_SLOPE = 0.2


def _bn_lrelu(x, gamma, beta):
    """BatchNorm1d (training-mode batch stats, biased variance, eps=1e-5) + leaky_relu(0.2).
    Single traversal: var = E[x^2] - mean^2 (zero-padded lanes stay exactly zero)."""
    n = x.shape[0]
    mean = jnp.sum(x, axis=0, keepdims=True) / n
    var = jnp.maximum(jnp.sum(x * x, axis=0, keepdims=True) / n - mean * mean, 0.0)
    xn = (x - mean) * lax.rsqrt(var + _EPS)
    xn = xn * gamma + beta
    return jnp.where(xn >= 0.0, xn, _NEG_SLOPE * xn)


def make_fused_kernel(num_rels: int):
    """Single dst tile (== all nodes): accumulate sum_r (A_r @ H) @ W_r with the
    BatchNorm + leaky_relu epilogue fused into the last relation step."""

    def kernel(a_ref, h_ref, w_ref, gamma_ref, beta_ref, out_ref, acc_ref):
        r = pl.program_id(0)

        @pl.when(r == 0)
        def _init():
            acc_ref[...] = jnp.zeros_like(acc_ref)

        # (A_r @ H) first (K = N, width = F_in), then @ W_r (K = F_in, width = F_pad).
        ah = jnp.dot(a_ref[...].astype(jnp.float32), h_ref[...],
                     preferred_element_type=jnp.float32)
        acc_ref[...] += jnp.dot(ah, w_ref[...], preferred_element_type=jnp.float32)

        @pl.when(r == num_rels - 1)
        def _finish():
            out_ref[...] = _bn_lrelu(acc_ref[...], gamma_ref[...], beta_ref[...])

    return kernel


def make_accum_kernel(num_rels: int):
    """dst-row tiles ("parallel") x relations ("arbitrary"): sum_r (A_r_tile @ H) @ W_r."""

    def kernel(a_ref, h_ref, w_ref, out_ref, acc_ref):
        r = pl.program_id(1)

        @pl.when(r == 0)
        def _init():
            acc_ref[...] = jnp.zeros_like(acc_ref)

        ah = jnp.dot(a_ref[...].astype(jnp.float32), h_ref[...],
                     preferred_element_type=jnp.float32)
        acc_ref[...] += jnp.dot(ah, w_ref[...], preferred_element_type=jnp.float32)

        @pl.when(r == num_rels - 1)
        def _store():
            out_ref[...] = acc_ref[...]

    return kernel


def bn_lrelu_kernel(x_ref, gamma_ref, beta_ref, o_ref):
    # One 128-wide feature tile, all N rows: per-feature batch stats + leaky_relu.
    o_ref[...] = _bn_lrelu(x_ref[...], gamma_ref[...], beta_ref[...])


def _vmem_bytes(tile_m, n_nodes, f_in, f_pad):
    a_tile = 2 * tile_m * n_nodes * 2        # double-buffered bf16 adjacency tile
    h_res = 2 * n_nodes * f_in * 4           # resident H (conservatively 2x)
    w_tile = 2 * f_in * f_pad * 4            # double-buffered per-relation weight
    out_tile = 2 * tile_m * f_pad * 4        # double-buffered output tile
    acc = tile_m * f_pad * 4                 # f32 accumulator scratch
    gb = 2 * 2 * f_pad * 4                   # gamma / beta
    return a_tile + h_res + w_tile + out_tile + acc + gb


def _pick_tile_m(n_nodes, f_in, f_pad, budget_bytes):
    # Candidates: full node count, or multiples of 16 dividing N (bf16 sublane tile
    # for the adjacency block AND f32 sublane tile for the output block).
    cands = sorted(
        {n_nodes} | {t for t in range(16, n_nodes, 16) if n_nodes % t == 0},
        reverse=True)
    for t in cands:
        if _vmem_bytes(t, n_nodes, f_in, f_pad) <= budget_bytes:
            return t
    return cands[-1]


def rgcn_layer_forward(h, adj, weight_rel, gamma, beta, *, tile_m=None,
                       vmem_budget_bytes=40 << 20):
    """h: (N, F_in) f32; adj: (R, N, N) f32; weight_rel: (R, F_in, F_out) f32;
    gamma/beta: (F_out,) f32."""
    n_nodes, f_in = h.shape
    num_rels, _, f_out = weight_rel.shape

    # Lane-pad the output feature dim so every kernel store is a full-lane vst.
    f_pad = ((f_out + _LANE - 1) // _LANE) * _LANE
    pad = f_pad - f_out
    w_pad = jnp.pad(weight_rel, ((0, 0), (0, 0), (0, pad)))
    gamma_pad = jnp.pad(gamma, (0, pad)).reshape(1, f_pad)
    beta_pad = jnp.pad(beta, (0, pad)).reshape(1, f_pad)

    # Adjacency in bf16: edge multiplicities are small integers (exact in bf16 up to
    # 256); widened to f32 on the VPU inside the kernel so the math stays f32-exact.
    adj_bf16 = adj.astype(jnp.bfloat16)

    if tile_m is None:
        tile_m = _pick_tile_m(n_nodes, f_in, f_pad, vmem_budget_bytes)
    assert n_nodes % tile_m == 0, "tile_m must divide the node count"
    assert tile_m == n_nodes or tile_m % 16 == 0, \
        "tile_m must be the full node count or a multiple of 16"
    n_tiles = n_nodes // tile_m

    vmem_limit = int(min(max(_vmem_bytes(tile_m, n_nodes, f_in, f_pad) + (8 << 20),
                             32 << 20), 64 << 20))

    if n_tiles == 1:
        # Launch-bound regime: fuse the BN + leaky_relu epilogue into the last
        # relation step; one pallas_call, no (N, F_pad) HBM round trip.
        out_pad = pl.pallas_call(
            make_fused_kernel(num_rels),
            out_shape=jax.ShapeDtypeStruct((n_nodes, f_pad), jnp.float32),
            grid_spec=pltpu.PrefetchScalarGridSpec(
                num_scalar_prefetch=0,
                grid=(num_rels,),
                in_specs=[
                    pl.BlockSpec((pl.Squeezed(), n_nodes, n_nodes),
                                 lambda r: (r, 0, 0)),                 # A_r (bf16)
                    pl.BlockSpec((n_nodes, f_in), lambda r: (0, 0)),   # H (resident)
                    pl.BlockSpec((pl.Squeezed(), f_in, f_pad),
                                 lambda r: (r, 0, 0)),                 # W_r (padded)
                    pl.BlockSpec((1, f_pad), lambda r: (0, 0)),        # gamma
                    pl.BlockSpec((1, f_pad), lambda r: (0, 0)),        # beta
                ],
                out_specs=pl.BlockSpec((n_nodes, f_pad), lambda r: (0, 0)),
                scratch_shapes=[pltpu.VMEM((n_nodes, f_pad), jnp.float32)],
            ),
            compiler_params=pltpu.CompilerParams(
                dimension_semantics=("arbitrary",),
                vmem_limit_bytes=vmem_limit),
        )(adj_bf16, h, w_pad, gamma_pad, beta_pad)
        return out_pad[:, :f_out]

    # Pass 1: dst-row tiles ("parallel") x relations ("arbitrary", reduction last).
    accum = pl.pallas_call(
        make_accum_kernel(num_rels),
        out_shape=jax.ShapeDtypeStruct((n_nodes, f_pad), jnp.float32),
        grid_spec=pltpu.PrefetchScalarGridSpec(
            num_scalar_prefetch=0,
            grid=(n_tiles, num_rels),
            in_specs=[
                pl.BlockSpec((pl.Squeezed(), tile_m, n_nodes),
                             lambda i, r: (r, i, 0)),                  # A_r dst tile
                pl.BlockSpec((n_nodes, f_in), lambda i, r: (0, 0)),    # H (resident)
                pl.BlockSpec((pl.Squeezed(), f_in, f_pad),
                             lambda i, r: (r, 0, 0)),                  # W_r (padded)
            ],
            out_specs=pl.BlockSpec((tile_m, f_pad), lambda i, r: (i, 0)),
            scratch_shapes=[pltpu.VMEM((tile_m, f_pad), jnp.float32)],
        ),
        compiler_params=pltpu.CompilerParams(
            dimension_semantics=("parallel", "arbitrary"),
            vmem_limit_bytes=vmem_limit),
    )(adj_bf16, h, w_pad)

    # Pass 2: BatchNorm over all N rows + leaky_relu, tiled along the feature/lane
    # axis (per-feature stats are independent of feature tiling) so per-step VMEM is
    # bounded by N*128*4 B and v7x can shard feature tiles across TensorCores.
    out_pad = pl.pallas_call(
        bn_lrelu_kernel,
        out_shape=jax.ShapeDtypeStruct((n_nodes, f_pad), jnp.float32),
        grid_spec=pltpu.PrefetchScalarGridSpec(
            num_scalar_prefetch=0,
            grid=(f_pad // _LANE,),
            in_specs=[
                pl.BlockSpec((n_nodes, _LANE), lambda j: (0, j)),
                pl.BlockSpec((1, _LANE), lambda j: (0, j)),
                pl.BlockSpec((1, _LANE), lambda j: (0, j)),
            ],
            out_specs=pl.BlockSpec((n_nodes, _LANE), lambda j: (0, j)),
        ),
        compiler_params=pltpu.CompilerParams(
            dimension_semantics=("parallel",),
            vmem_limit_bytes=vmem_limit),
    )(accum, gamma_pad, beta_pad)

    return out_pad[:, :f_out]


def xavier_uniform(key, shape, gain):
    # fan_in / fan_out as in torch.nn.init for 2D/3D tensors
    if len(shape) == 2:
        fan_out, fan_in = shape[0], shape[1]
    else:
        rf = int(np.prod(shape[2:]))
        fan_in, fan_out = shape[1] * rf, shape[0] * rf
    bound = gain * math.sqrt(6.0 / (fan_in + fan_out))
    return jax.random.uniform(key, shape, jnp.float32, -bound, bound)


def reference_forward(h, adj, weight_rel, gamma, beta):
    """Plain-JAX reference of the same semantics (for a sanity check)."""
    out = jnp.einsum("rns,sf,rfo->no", adj, h, weight_rel)
    mean = jnp.mean(out, axis=0, keepdims=True)
    var = jnp.mean((out - mean) ** 2, axis=0, keepdims=True)
    hn = (out - mean) / jnp.sqrt(var + 1e-5) * gamma + beta
    return jnp.where(hn >= 0.0, hn, 0.2 * hn)


def build_example(key, *, n_nodes, in_feat, out_feat, num_rels, num_bases, num_edges):
    k_w, k_c, k_h, k_src, k_dst, k_rel = jax.random.split(key, 6)
    gain = math.sqrt(2.0 / (1.0 + _NEG_SLOPE ** 2))   # calculate_gain('leaky_relu', 0.2)

    # Parameters (deterministic, synthetic — shapes from __init__)
    weight_bases = xavier_uniform(k_w, (num_bases, in_feat, out_feat), gain)   # self.weight
    w_comp = xavier_uniform(k_c, (num_rels, num_bases), gain)                  # self.w_comp
    gamma = jnp.ones((out_feat,), jnp.float32)                                 # BatchNorm weight
    beta = jnp.zeros((out_feat,), jnp.float32)                                 # BatchNorm bias

    # Basis decomposition, reproducing the exact view/matmul/view sequence (glue, plain JAX).
    w_viewed = weight_bases.reshape(in_feat, num_bases, out_feat)
    weight_rel = jnp.einsum("rb,ibo->iro", w_comp, w_viewed).reshape(
        num_rels, in_feat, out_feat)

    # Graph: node features + edge list (src, dst, rel_type), densified into adjacency.
    h = jax.random.normal(k_h, (n_nodes, in_feat), jnp.float32)                # edges.src['h']
    src = jax.random.randint(k_src, (num_edges,), 0, n_nodes)
    dst = jax.random.randint(k_dst, (num_edges,), 0, n_nodes)
    rel = jax.random.randint(k_rel, (num_edges,), 0, num_rels)
    adj = jnp.zeros((num_rels, n_nodes, n_nodes), jnp.float32).at[
        rel, dst, src].add(1.0)                                                # fn.sum aggregation
    return h, adj, weight_rel, gamma, beta


if __name__ == "__main__":
    key = jax.random.PRNGKey(0)
    k1, k2 = jax.random.split(key)

    # Config 1: single dst tile -> fused BN+leaky_relu epilogue path (module-scale demo).
    args1 = build_example(k1, n_nodes=16, in_feat=32, out_feat=32,
                          num_rels=4, num_bases=2, num_edges=48)
    out1 = jax.block_until_ready(rgcn_layer_forward(*args1))
    ref1 = reference_forward(*args1)
    np.testing.assert_allclose(np.asarray(out1), np.asarray(ref1), rtol=1e-4, atol=1e-4)

    # Config 2: forced dst-row tiling (tile_m < N) to exercise the tiled accumulation
    # + feature-tiled BatchNorm pass.
    args2 = build_example(k2, n_nodes=32, in_feat=32, out_feat=32,
                          num_rels=4, num_bases=2, num_edges=96)
    out2 = jax.block_until_ready(rgcn_layer_forward(*args2, tile_m=16))
    ref2 = reference_forward(*args2)
    np.testing.assert_allclose(np.asarray(out2), np.asarray(ref2), rtol=1e-4, atol=1e-4)

    print("KERNEL_OK")
</pallas_src>

<mosaic_0001>
module attributes {stable_mosaic.version = 11 : i64} {
  func.func @kernel(%arg0: i32, %arg1: memref<1x16x16xbf16, #tpu.memory_space<vmem>>, %arg2: memref<16x32xf32, #tpu.memory_space<vmem>>, %arg3: memref<1x32x128xf32, #tpu.memory_space<vmem>>, %arg4: memref<1x128xf32, #tpu.memory_space<vmem>>, %arg5: memref<1x128xf32, #tpu.memory_space<vmem>>, %arg6: memref<16x128xf32, #tpu.memory_space<vmem>>, %arg7: memref<16x128xf32, #tpu.memory_space<vmem>>) attributes {dimension_semantics = [#tpu.dimension_semantics<arbitrary>], iteration_bounds = array<i64: 4>, scalar_prefetch = 0 : i64, scratch_operands = 1 : i64, tpu.core_type = #tpu.core_type<tc>, window_params = [{transform_indices = @transform_0, window_bounds = array<i64: 1, 16, 16>}, {pipeline_mode = #tpu.pipeline_mode<synchronous>, transform_indices = @transform_1, window_bounds = array<i64: 16, 32>}, {transform_indices = @transform_2, window_bounds = array<i64: 1, 32, 128>}, {pipeline_mode = #tpu.pipeline_mode<synchronous>, transform_indices = @transform_3, window_bounds = array<i64: 1, 128>}, {pipeline_mode = #tpu.pipeline_mode<synchronous>, transform_indices = @transform_4, window_bounds = array<i64: 1, 128>}, {pipeline_mode = #tpu.pipeline_mode<synchronous>, transform_indices = @transform_5, window_bounds = array<i64: 16, 128>}]} {
    %c0_i32 = arith.constant 0 : i32
    %0 = arith.cmpi eq, %arg0, %c0_i32 : i32
    %1 = arith.extui %0 : i1 to i32
    %c0_i32_0 = arith.constant 0 : i32
    %2 = arith.cmpi ne, %1, %c0_i32_0 : i32
    scf.if %2 {
      %cst_14 = arith.constant 0.000000e+00 : f32
      %17 = vector.broadcast %cst_14 : f32 to vector<16x128xf32>
      %c0_15 = arith.constant 0 : index
      %c0_16 = arith.constant 0 : index
      %18 = vector.load %arg7[%c0_15, %c0_16] : memref<16x128xf32, #tpu.memory_space<vmem>>, vector<16x128xf32>
      tpu.vector_store %arg7[%c0_15, %c0_16], %17 {strides = array<i32>} : memref<16x128xf32, #tpu.memory_space<vmem>>, vector<16x128xf32>,
    } else {
    }
    %c0 = arith.constant 0 : index
    %c0_1 = arith.constant 0 : index
    %c0_2 = arith.constant 0 : index
    %3 = vector.load %arg1[%c0, %c0_1, %c0_2] : memref<1x16x16xbf16, #tpu.memory_space<vmem>>, vector<1x16x16xbf16>
    %4 = vector.shape_cast %3 : vector<1x16x16xbf16> to vector<16x16xbf16>
    %5 = arith.extf %4 : vector<16x16xbf16> to vector<16x16xf32>
    %c0_3 = arith.constant 0 : index
    %c0_4 = arith.constant 0 : index
    %6 = vector.load %arg2[%c0_3, %c0_4] : memref<16x32xf32, #tpu.memory_space<vmem>>, vector<16x32xf32>
    %cst = arith.constant dense<0.000000e+00> : vector<16x32xf32>
    %7 = tpu.matmul %5, %6, %cst {dimension_numbers = #tpu.dot_dimension_numbers<[1], [0], [0], [1], [0, 0, 1, 1], [], []>} : vector<16x16xf32>, vector<16x32xf32>, vector<16x32xf32> -> vector<16x32xf32>
    %c0_5 = arith.constant 0 : index
    %c0_6 = arith.constant 0 : index
    %8 = vector.load %arg7[%c0_5, %c0_6] : memref<16x128xf32, #tpu.memory_space<vmem>>, vector<16x128xf32>
    %c0_7 = arith.constant 0 : index
    %c0_8 = arith.constant 0 : index
    %c0_9 = arith.constant 0 : index
    %9 = vector.load %arg3[%c0_7, %c0_8, %c0_9] : memref<1x32x128xf32, #tpu.memory_space<vmem>>, vector<1x32x128xf32>
    %10 = vector.shape_cast %9 : vector<1x32x128xf32> to vector<32x128xf32>
    %cst_10 = arith.constant dense<0.000000e+00> : vector<16x128xf32>
    %11 = tpu.matmul %7, %10, %cst_10 {dimension_numbers = #tpu.dot_dimension_numbers<[1], [0], [0], [1], [0, 0, 1, 1], [], []>} : vector<16x32xf32>, vector<32x128xf32>, vector<16x128xf32> -> vector<16x128xf32>
    %12 = arith.addf %8, %11 : vector<16x128xf32>
    %c0_11 = arith.constant 0 : index
    %c0_12 = arith.constant 0 : index
    %13 = vector.load %arg7[%c0_11, %c0_12] : memref<16x128xf32, #tpu.memory_space<vmem>>, vector<16x128xf32>
    tpu.vector_store %arg7[%c0_11, %c0_12], %12 {strides = array<i32>} : memref<16x128xf32, #tpu.memory_space<vmem>>, vector<16x128xf32>,
    %c3_i32 = arith.constant 3 : i32
    %14 = arith.cmpi eq, %arg0, %c3_i32 : i32
    %15 = arith.extui %14 : i1 to i32
    %c0_i32_13 = arith.constant 0 : i32
    %16 = arith.cmpi ne, %15, %c0_i32_13 : i32
    scf.if %16 {
      %c0_14 = arith.constant 0 : index
      %c0_15 = arith.constant 0 : index
      %17 = vector.load %arg7[%c0_14, %c0_15] : memref<16x128xf32, #tpu.memory_space<vmem>>, vector<16x128xf32>
      %c0_16 = arith.constant 0 : index
      %c0_17 = arith.constant 0 : index
      %18 = vector.load %arg4[%c0_16, %c0_17] : memref<1x128xf32, #tpu.memory_space<vmem>>, vector<1x128xf32>
      %c0_18 = arith.constant 0 : index
      %c0_19 = arith.constant 0 : index
      %19 = vector.load %arg5[%c0_18, %c0_19] : memref<1x128xf32, #tpu.memory_space<vmem>>, vector<1x128xf32>
      %cst_20 = arith.constant dense<0.000000e+00> : vector<128xf32>
      %20 = vector.multi_reduction <add>, %17, %cst_20 [0] : vector<16x128xf32> to vector<128xf32>
      %21 = vector.shape_cast %20 : vector<128xf32> to vector<1x128xf32>
      %cst_21 = arith.constant 1.600000e+01 : f32
      %22 = vector.broadcast %cst_21 : f32 to vector<1x128xf32>
      %23 = arith.divf %21, %22 : vector<1x128xf32>
      %24 = arith.mulf %17, %17 : vector<16x128xf32>
      %cst_22 = arith.constant dense<0.000000e+00> : vector<128xf32>
      %25 = vector.multi_reduction <add>, %24, %cst_22 [0] : vector<16x128xf32> to vector<128xf32>
      %26 = vector.shape_cast %25 : vector<128xf32> to vector<1x128xf32>
      %cst_23 = arith.constant 1.600000e+01 : f32
      %27 = vector.broadcast %cst_23 : f32 to vector<1x128xf32>
      %28 = arith.divf %26, %27 : vector<1x128xf32>
      %29 = arith.mulf %23, %23 : vector<1x128xf32>
      %30 = arith.subf %28, %29 : vector<1x128xf32>
      %cst_24 = arith.constant 0.000000e+00 : f32
      %31 = vector.broadcast %cst_24 : f32 to vector<1x128xf32>
      %32 = arith.maximumf %30, %31 : vector<1x128xf32>
      %33 = vector.broadcast %23 : vector<1x128xf32> to vector<16x128xf32>
      %34 = arith.subf %17, %33 : vector<16x128xf32>
      %cst_25 = arith.constant 9.99999974E-6 : f32
      %35 = vector.broadcast %cst_25 : f32 to vector<1x128xf32>
      %36 = arith.addf %32, %35 : vector<1x128xf32>
      %37 = math.rsqrt %36 : vector<1x128xf32>
      %38 = vector.broadcast %37 : vector<1x128xf32> to vector<16x128xf32>
      %39 = arith.mulf %34, %38 : vector<16x128xf32>
      %40 = vector.broadcast %18 : vector<1x128xf32> to vector<16x128xf32>
      %41 = arith.mulf %39, %40 : vector<16x128xf32>
      %42 = vector.broadcast %19 : vector<1x128xf32> to vector<16x128xf32>
      %43 = arith.addf %41, %42 : vector<16x128xf32>
      %cst_26 = arith.constant 0.000000e+00 : f32
      %44 = vector.broadcast %cst_26 : f32 to vector<16x128xf32>
      %45 = arith.cmpf oge, %43, %44 : vector<16x128xf32>
      %cst_27 = arith.constant 2.000000e-01 : f32
      %46 = vector.broadcast %cst_27 : f32 to vector<16x128xf32>
      %47 = arith.mulf %46, %43 : vector<16x128xf32>
      %48 = arith.select %45, %43, %47 : vector<16x128xi1>, vector<16x128xf32>
      %c0_28 = arith.constant 0 : index
      %c0_29 = arith.constant 0 : index
      %49 = vector.load %arg6[%c0_28, %c0_29] : memref<16x128xf32, #tpu.memory_space<vmem>>, vector<16x128xf32>
      tpu.vector_store %arg6[%c0_28, %c0_29], %48 {strides = array<i32>} : memref<16x128xf32, #tpu.memory_space<vmem>>, vector<16x128xf32>,
    } else {
    }
    return
  }
  func.func @transform_0(%arg0: i32) -> (i32, i32, i32) {
    %c0_i32 = arith.constant 0 : i32
    %c0_i32_0 = arith.constant 0 : i32
    %c0_i32_1 = arith.constant 0 : i32
    return %arg0, %c0_i32, %c0_i32_0 : i32, i32, i32
  }
  func.func @transform_1(%arg0: i32) -> (i32, i32) {
    %c0_i32 = arith.constant 0 : i32
    %c0_i32_0 = arith.constant 0 : i32
    %c0_i32_1 = arith.constant 0 : i32
    return %c0_i32, %c0_i32_0 : i32, i32
  }
  func.func @transform_2(%arg0: i32) -> (i32, i32, i32) {
    %c0_i32 = arith.constant 0 : i32
    %c0_i32_0 = arith.constant 0 : i32
    %c0_i32_1 = arith.constant 0 : i32
    return %arg0, %c0_i32, %c0_i32_0 : i32, i32, i32
  }
  func.func @transform_3(%arg0: i32) -> (i32, i32) {
    %c0_i32 = arith.constant 0 : i32
    %c0_i32_0 = arith.constant 0 : i32
    %c0_i32_1 = arith.constant 0 : i32
    return %c0_i32, %c0_i32_0 : i32, i32
  }
  func.func @transform_4(%arg0: i32) -> (i32, i32) {
    %c0_i32 = arith.constant 0 : i32
    %c0_i32_0 = arith.constant 0 : i32
    %c0_i32_1 = arith.constant 0 : i32
    return %c0_i32, %c0_i32_0 : i32, i32
  }
  func.func @transform_5(%arg0: i32) -> (i32, i32) {
    %c0_i32 = arith.constant 0 : i32
    %c0_i32_0 = arith.constant 0 : i32
    %c0_i32_1 = arith.constant 0 : i32
    return %c0_i32, %c0_i32_0 : i32, i32
  }
}

</mosaic_0001>

<llo_original>
// kernel: tpu_custom_call.1
$region0: #{tpu_custom_call.1}
  #allocation0 [shape = 'u32[]', space=smem, size = 0x4, offset = 0x4, fixed_abs, tag = 'smem constant byte address 0x4 - core index']
  #allocation1 [shape = 'u32[144,128]{1,0:T(1,128)}', space=vmem, size = 0x12000, scoped, tag = 'internal scratch']
  #allocation2 [shape = 'f32[16,128]{1,0:T(8,128)}', space=vmem, size = 0x2000, scoped, tag = 'scratch operand']
  %s0 = inlined_call_operand.hbm [shape: bf16[4,16,16], index: 0, kind: input, shape index: {}]
  %s1 = inlined_call_operand.hbm [shape: f32[16,32], index: 1, kind: input, shape index: {}]
  %s2 = inlined_call_operand.hbm [shape: f32[4,32,128], index: 2, kind: input, shape index: {}]
  %s3 = inlined_call_operand.vmem [shape: f32[1,128], index: 3, kind: input, shape index: {}]
  %s4 = inlined_call_operand.vmem [shape: f32[1,128], index: 4, kind: input, shape index: {}]
  %s5 = inlined_call_operand.hbm [shape: f32[16,128], index: 5, kind: output, shape index: {}]
  %s6 = sld [smem:[#allocation0]]
  $region73: #{tpu_custom_call.1} parent=0
    _
  %s8 = ssub.s32 1, %s6
  %s9 = scalar_select 0, %s8, %s6
  $region1: #{tpu_custom_call.1} parent=0
    #allocation3 [shape = 'u8[8192]{0}', space=vmem, size = 0x2000, scoped, tag = 'input window, operand 0']
    #allocation4 [shape = 's32[2]{0}', space=sflag, size = 0x8, scoped, tag = 'scoped memory for tpu_custom_call.1']
    #allocation5 [shape = 's32[2]{0}', space=sflag, size = 0x8, scoped, tag = 'scoped memory for tpu_custom_call.1']
    #allocation6 [shape = 'u8[8192]{0}', space=vmem, size = 0x2000, scoped, tag = 'input window, operand 1, single buffered']
    #allocation7 [shape = 's32[1]{0}', space=sflag, size = 0x4, scoped, tag = 'scoped memory for tpu_custom_call.1']
    #allocation8 [shape = 'u8[32768]{0}', space=vmem, size = 0x8000, scoped, tag = 'input window, operand 2']
    #allocation9 [shape = 'u8[8192]{0}', space=vmem, size = 0x2000, scoped, tag = 'output window, operand 0, single buffered']
    %10 = vsyncpa [#allocation4], 0
    %s11 = scalar_lea.sflag [#allocation4], 1
    %12 = vsyncpa %s11, 0
    %13 = vsyncpa [#allocation7], 0
    %14 = vsyncpa [#allocation5], 0
    loop: start=0, step=1, limit=6
    $region2: #{tpu_custom_call.1} parent=1 // loop_pre_header
      _
    $region3: #{tpu_custom_call.1} parent=1 // loop_header
      %s16 = sphi 0, %s20
      %p17 = scmp.ge.s32.totalorder %s16, 6
      %s26 = sphi 0, %s28
      %s29 = sphi 0, %s26
      %s30 = sphi 0, %s29
      %s46 = sphi 0, %s30
      %s50 = sphi 0, %s50
      %s52 = sphi 0, %s50
      %s53 = sphi 0, %s52
      %s67 = sphi 0, %s53
      %s73 = sphi 0, %s75
      %s76 = sphi 0, %s73
      %s77 = sphi 0, %s76
      %s93 = sphi 0, %s77
      %s97 = sphi 0, %s97
      %s99 = sphi 0, %s97
      %s100 = sphi 0, %s99
      %s114 = sphi 0, %s100
      %s118 = sphi 0, %s118
      %s120 = sphi 0, %s118
      %s121 = sphi 0, %s120
      %s135 = sphi 0, %s121
      %s139 = sphi 0, %s139
      %s141 = sphi 0, %s139
      %s142 = sphi 0, %s141
      %s156 = sphi 0, %s142
    $region4: #{tpu_custom_call.1} parent=1 // loop_header_branch
      %19 = sbr.rel (%p17) target = $region8
    $region5: #{tpu_custom_call.1} parent=1 // loop_body
      %s21 = ssub.s32 %s16, 1
      %s22 = ssub.s32 %s16, 2
      %s23 = sadd.s32 %s16, 1
      %s24 = ssub.s32 %s16, %s23
      %p25 = scmp.eq.s32.totalorder %s24, 0
      %s27 = sadd.s32 %s26, 1
      %s28 = scalar_select %p25, %s26, %s27
      %p31 = pneg %p25
      %p32 = scmp.eq.s32.totalorder %s16, 3
      %p33 = por %p31, %p32
      %p34 = scmp.ne.s32.totalorder %s26, %s29
      %p35 = scmp.eq.s32.totalorder %s16, 0
      %p36 = por %p34, %p35
      %p37 = scmp.ne.s32.totalorder %s26, %s29
      %p38 = scmp.eq.s32.totalorder %s21, 3
      %p39 = por %p37, %p38
      %p40 = scmp.ne.s32.totalorder %s29, %s30
      %p41 = scmp.eq.s32.totalorder %s21, 0
      %p42 = por %p40, %p41
      %p43 = scmp.ne.s32.totalorder %s29, %s30
      %p44 = scmp.eq.s32.totalorder %s22, 3
      %p45 = por %p43, %p44
      %p47 = scmp.ne.s32.totalorder %s30, %s46
      %p48 = scmp.eq.s32.totalorder %s22, 0
      %p49 = por %p47, %p48
      %s51 = sadd.s32 %s50, 1
      %p54 = scmp.eq.s32.totalorder %s16, 3
      %p55 = scmp.ne.s32.totalorder %s50, %s52
      %p56 = scmp.eq.s32.totalorder %s16, 0
      %p57 = por %p55, %p56
      %p58 = scmp.ne.s32.totalorder %s50, %s52
      %p59 = scmp.eq.s32.totalorder %s21, 3
      %p60 = por %p58, %p59
      %p61 = scmp.ne.s32.totalorder %s52, %s53
      %p62 = scmp.eq.s32.totalorder %s21, 0
      %p63 = por %p61, %p62
      %p64 = scmp.ne.s32.totalorder %s52, %s53
      %p65 = scmp.eq.s32.totalorder %s22, 3
      %p66 = por %p64, %p65
      %p68 = scmp.ne.s32.totalorder %s53, %s67
      %p69 = scmp.eq.s32.totalorder %s22, 0
      %p70 = por %p68, %p69
      %s71 = ssub.s32 %s16, %s23
      %p72 = scmp.eq.s32.totalorder %s71, 0
      %s74 = sadd.s32 %s73, 1
      %s75 = scalar_select %p72, %s73, %s74
      %p78 = pneg %p72
      %p79 = scmp.eq.s32.totalorder %s16, 3
      %p80 = por %p78, %p79
      %p81 = scmp.ne.s32.totalorder %s73, %s76
      %p82 = scmp.eq.s32.totalorder %s16, 0
      %p83 = por %p81, %p82
      %p84 = scmp.ne.s32.totalorder %s73, %s76
      %p85 = scmp.eq.s32.totalorder %s21, 3
      %p86 = por %p84, %p85
      %p87 = scmp.ne.s32.totalorder %s76, %s77
      %p88 = scmp.eq.s32.totalorder %s21, 0
      %p89 = por %p87, %p88
      %p90 = scmp.ne.s32.totalorder %s76, %s77
      %p91 = scmp.eq.s32.totalorder %s22, 3
      %p92 = por %p90, %p91
      %p94 = scmp.ne.s32.totalorder %s77, %s93
      %p95 = scmp.eq.s32.totalorder %s22, 0
      %p96 = por %p94, %p95
      %s98 = sadd.s32 %s97, 1
      %p101 = scmp.eq.s32.totalorder %s16, 3
      %p102 = scmp.ne.s32.totalorder %s97, %s99
      %p103 = scmp.eq.s32.totalorder %s16, 0
      %p104 = por %p102, %p103
      %p105 = scmp.ne.s32.totalorder %s97, %s99
      %p106 = scmp.eq.s32.totalorder %s21, 3
      %p107 = por %p105, %p106
      %p108 = scmp.ne.s32.totalorder %s99, %s100
      %p109 = scmp.eq.s32.totalorder %s21, 0
      %p110 = por %p108, %p109
      %p111 = scmp.ne.s32.totalorder %s99, %s100
      %p112 = scmp.eq.s32.totalorder %s22, 3
      %p113 = por %p111, %p112
      %p115 = scmp.ne.s32.totalorder %s100, %s114
      %p116 = scmp.eq.s32.totalorder %s22, 0
      %p117 = por %p115, %p116
      %s119 = sadd.s32 %s118, 1
      %p122 = scmp.eq.s32.totalorder %s16, 3
      %p123 = scmp.ne.s32.totalorder %s118, %s120
      %p124 = scmp.eq.s32.totalorder %s16, 0
      %p125 = por %p123, %p124
      %p126 = scmp.ne.s32.totalorder %s118, %s120
      %p127 = scmp.eq.s32.totalorder %s21, 3
      %p128 = por %p126, %p127
      %p129 = scmp.ne.s32.totalorder %s120, %s121
      %p130 = scmp.eq.s32.totalorder %s21, 0
      %p131 = por %p129, %p130
      %p132 = scmp.ne.s32.totalorder %s120, %s121
      %p133 = scmp.eq.s32.totalorder %s22, 3
      %p134 = por %p132, %p133
      %p136 = scmp.ne.s32.totalorder %s121, %s135
      %p137 = scmp.eq.s32.totalorder %s22, 0
      %p138 = por %p136, %p137
      %s140 = sadd.s32 %s139, 1
      %p143 = scmp.eq.s32.totalorder %s16, 3
      %p144 = scmp.ne.s32.totalorder %s139, %s141
      %p145 = scmp.eq.s32.totalorder %s16, 0
      %p146 = por %p144, %p145
      %p147 = scmp.ne.s32.totalorder %s139, %s141
      %p148 = scmp.eq.s32.totalorder %s21, 3
      %p149 = por %p147, %p148
      %p150 = scmp.ne.s32.totalorder %s141, %s142
      %p151 = scmp.eq.s32.totalorder %s21, 0
      %p152 = por %p150, %p151
      %p153 = scmp.ne.s32.totalorder %s141, %s142
      %p154 = scmp.eq.s32.totalorder %s22, 3
      %p155 = por %p153, %p154
      %p157 = scmp.ne.s32.totalorder %s142, %s156
      %p158 = scmp.eq.s32.totalorder %s22, 0
      %p159 = por %p157, %p158
      %p160 = scmp.le.s32.totalorder 1, %s16
      %p161 = scmp.lt.s32.totalorder %s16, 5
      %p162 = pnand %p160, %p161
      %p163 = pneg %p162
      // Predicated region
      $region9: #{tpu_custom_call.1} parent=5 // pred_check
        _
      $region10: #{tpu_custom_call.1} parent=5 // pred_check_branch
        %165 = sbr.rel (%p162) target = $region12
      $region11: #{tpu_custom_call.1} parent=5 // pred_region
        %s166 = ssub.s32 %s16, 1
        // Predicated region
        $region13: #{tpu_custom_call.1} parent=11 // pred_check
          %p167 = pneg %p63
        $region14: #{tpu_custom_call.1} parent=11 // pred_check_branch
          %169 = sbr.rel (%p167) target = $region16
        $region15: #{tpu_custom_call.1} parent=11 // pred_region
          %s171 = ssub.s32 256, 256
          %172 = vsyncadd [#allocation7], %s171
          %s173 = sshll.u32 [#allocation6], 4
          %s174 = int_to_ptr.vmem [resolvable:$true] %s173
          %179 = dma.hbm_to_vmem [thread:$0]  %s1, 256, %s174, [#allocation7], 128, 128, 8
        $region16: #{tpu_custom_call.1} parent=11 // pred_fallthru
          _
        // Predicated region
        $region17: #{tpu_custom_call.1} parent=11 // pred_check
          %p180 = pneg %p110
        $region18: #{tpu_custom_call.1} parent=11 // pred_check_branch
          %182 = sbr.rel (%p180) target = $region20
        $region19: #{tpu_custom_call.1} parent=11 // pred_region
          _
        $region20: #{tpu_custom_call.1} parent=11 // pred_fallthru
          _
        // Predicated region
        $region21: #{tpu_custom_call.1} parent=11 // pred_check
          %p183 = pneg %p131
        $region22: #{tpu_custom_call.1} parent=11 // pred_check_branch
          %185 = sbr.rel (%p183) target = $region24
        $region23: #{tpu_custom_call.1} parent=11 // pred_region
          _
        $region24: #{tpu_custom_call.1} parent=11 // pred_fallthru
          _
      $region12: #{tpu_custom_call.1} parent=5 // pred_fallthru
        _
      %p186 = scmp.lt.s32.totalorder %s16, 4
      // Predicated region
      $region25: #{tpu_custom_call.1} parent=5 // pred_check
        %p187 = pneg %p186
      $region26: #{tpu_custom_call.1} parent=5 // pred_check_branch
        %189 = sbr.rel (%p187) target = $region28
      $region27: #{tpu_custom_call.1} parent=5 // pred_region
        // Predicated region
        $region29: #{tpu_custom_call.1} parent=27 // pred_check
          %p190 = pneg %p36
        $region30: #{tpu_custom_call.1} parent=27 // pred_check_branch
          %192 = sbr.rel (%p190) target = $region32
        $region31: #{tpu_custom_call.1} parent=27 // pred_region
          %s193 = sand.u32 %s16, 1
          %s194 = scalar_lea.sflag [#allocation4], %s193
          %s195 = sand.u32 %s26, 1
          %s196 = smul.addr %s195, 8
          %s197 = scalar_lea.vmem [#allocation3], %s196
          %s199 = ssub.s32 128, 128
          %200 = vsyncadd %s194, %s199
          %s201 = smul.addr %s16, 2
          %s202 = smul.addr %s201, 64
          %s203 = scalar_lea.hbm %s0, %s202
          %s204 = sshll.u32 %s197, 4
          %s205 = int_to_ptr.vmem [resolvable:$true] %s204
          %210 = dma.hbm_to_vmem [thread:$0]  %s203, 128, %s205, %s194, 64, 64, 4
        $region32: #{tpu_custom_call.1} parent=27 // pred_fallthru
          _
        // Predicated region
        $region33: #{tpu_custom_call.1} parent=27 // pred_check
          %p211 = pneg %p83
        $region34: #{tpu_custom_call.1} parent=27 // pred_check_branch
          %213 = sbr.rel (%p211) target = $region36
        $region35: #{tpu_custom_call.1} parent=27 // pred_region
          %s214 = sand.u32 %s16, 1
          %s215 = scalar_lea.sflag [#allocation4], %s214
          %s216 = sand.u32 %s73, 1
          %s217 = smul.addr %s216, 32
          %s218 = scalar_lea.vmem [#allocation8], %s217
          %s220 = ssub.s32 512, 512
          %221 = vsyncadd %s215, %s220
          %s222 = smul.addr %s16, 4
          %s223 = smul.addr %s222, 128
          %s224 = scalar_lea.hbm %s2, %s223
          %s225 = sshll.u32 %s218, 4
          %s226 = int_to_ptr.vmem [resolvable:$true] %s225
          %231 = dma.hbm_to_vmem [thread:$0]  %s224, 512, %s226, %s215, 128, 128, 8
        $region36: #{tpu_custom_call.1} parent=27 // pred_fallthru
          _
      $region28: #{tpu_custom_call.1} parent=5 // pred_fallthru
        _
      %p232 = scmp.le.s32.totalorder 1, %s16
      %p233 = scmp.lt.s32.totalorder %s16, 5
      %p234 = pnand %p232, %p233
      %p235 = pneg %p234
      // Predicated region
      $region37: #{tpu_custom_call.1} parent=5 // pred_check
        _
      $region38: #{tpu_custom_call.1} parent=5 // pred_check_branch
        %237 = sbr.rel (%p234) target = $region40
      $region39: #{tpu_custom_call.1} parent=5 // pred_region
        %s238 = ssub.s32 %s16, 1
        %s239 = sand.u32 %s21, 1
        %s240 = scalar_lea.sflag [#allocation4], %s239
        %s241 = sand.u32 %s29, 1
        %s242 = smul.addr %s241, 8
        %s243 = scalar_lea.vmem [#allocation3], %s242
        // Predicated region
        $region41: #{tpu_custom_call.1} parent=39 // pred_check
          %p244 = pneg %p42
        $region42: #{tpu_custom_call.1} parent=39 // pred_check_branch
          %246 = sbr.rel (%p244) target = $region44
        $region43: #{tpu_custom_call.1} parent=39 // pred_region
          %247 = dma.done %s240, 128
        $region44: #{tpu_custom_call.1} parent=39 // pred_fallthru
          _
        // Predicated region
        $region45: #{tpu_custom_call.1} parent=39 // pred_check
          %p248 = pneg %p63
        $region46: #{tpu_custom_call.1} parent=39 // pred_check_branch
          %250 = sbr.rel (%p248) target = $region48
        $region47: #{tpu_custom_call.1} parent=39 // pred_region
          %251 = dma.done [#allocation7], 256
        $region48: #{tpu_custom_call.1} parent=39 // pred_fallthru
          _
        %s252 = sand.u32 %s21, 1
        %s253 = scalar_lea.sflag [#allocation4], %s252
        %s254 = sand.u32 %s76, 1
        %s255 = smul.addr %s254, 32
        %s256 = scalar_lea.vmem [#allocation8], %s255
        // Predicated region
        $region49: #{tpu_custom_call.1} parent=39 // pred_check
          %p257 = pneg %p89
        $region50: #{tpu_custom_call.1} parent=39 // pred_check_branch
          %259 = sbr.rel (%p257) target = $region52
        $region51: #{tpu_custom_call.1} parent=39 // pred_region
          %260 = dma.done %s253, 512
        $region52: #{tpu_custom_call.1} parent=39 // pred_fallthru
          _
        %s261 = sand.u32 %s21, 1
        %s262 = scalar_lea.sflag [#allocation4], %s261
        %s263 = sand.u32 %s29, 1
        %s264 = smul.addr %s263, 8
        %s265 = scalar_lea.vmem [#allocation3], %s264
        %p266 = pneg %p42
        %p267 = pneg %p39
        %p268 = pneg %p63
        %p269 = pneg %p60
        %s270 = sand.u32 %s21, 1
        %s271 = scalar_lea.sflag [#allocation4], %s270
        %s272 = sand.u32 %s76, 1
        %s273 = smul.addr %s272, 32
        %s274 = scalar_lea.vmem [#allocation8], %s273
        %p275 = pneg %p89
        %p276 = pneg %p86
        %p277 = pneg %p110
        %p278 = pneg %p107
        %p279 = pneg %p131
        %p280 = pneg %p128
        %p281 = pneg %p152
        %p282 = pneg %p149
        %p283 = scmp.eq.s32.totalorder %s21, 0
        // Predicated region
        $region53: #{tpu_custom_call.1} parent=39 // pred_check
          %p284 = pneg %p283
        $region54: #{tpu_custom_call.1} parent=39 // pred_check_branch
          %286 = sbr.rel (%p284) target = $region56
        $region55: #{tpu_custom_call.1} parent=39 // pred_region
          %287 = vst [vmem:[#allocation2] sm:$0xff] 0.0
          %288 = vst [vmem:[#allocation2 + $0x8] sm:$0xff] 0.0
        $region56: #{tpu_custom_call.1} parent=39 // pred_fallthru
          _
        %v289 = vld [vmem:[%s243] sm:$0xf]
        %v290 = vld [vmem:[%s243 + $0x4] sm:$0xf]
        %v291 = vunpack.c.l.bf16 %v289
        %v292 = vunpack.c.l.bf16 %v290
        %v293 = vld [vmem:[#allocation6] sm:$0xff]
        %v294 = vld [vmem:[#allocation6 + $0x8] sm:$0xff]
        %vm295 = vcmask 130048
        %v297 = vsel %vm295, %v291, 0
        %v300 = vsel %vm295, %v292, 0
        %302 = vmatprep.subr.mxu0 0.0
        %303 = vmatpush1.msra.mxu0 %v293
        %304 = vmatprep.subr.mxu0 0.0
        %305 = vmatpush1.msra.mxu0 %v294
        %306 = vmatprep.subr.mxu0 0.0
        %307 = vmatpush1.msra.mxu0 0.0
        %308 = vmatprep.subr.mxu0 0.0
        %309 = vmatpush1.msra.mxu0 0.0
        %310 = vmatprep.subr.mxu0 0.0
        %311 = vmatpush1.msra.mxu0 0.0
        %312 = vmatprep.subr.mxu0 0.0
        %313 = vmatpush1.msra.mxu0 0.0
        %314 = vmatprep.subr.mxu0 0.0
        %315 = vmatpush1.msra.mxu0 0.0
        %316 = vmatprep.subr.mxu0 0.0
        %317 = vmatpush1.msra.mxu0 0.0
        %318 = vmatprep.subr.mxu0 0.0
        %319 = vmatpush1.msra.mxu0 0.0
        %320 = vmatprep.subr.mxu0 0.0
        %321 = vmatpush1.msra.mxu0 0.0
        %322 = vmatprep.subr.mxu0 0.0
        %323 = vmatpush1.msra.mxu0 0.0
        %324 = vmatprep.subr.mxu0 0.0
        %325 = vmatpush1.msra.mxu0 0.0
        %326 = vmatprep.subr.mxu0 0.0
        %327 = vmatpush1.msra.mxu0 0.0
        %328 = vmatprep.subr.mxu0 0.0
        %329 = vmatpush1.msra.mxu0 0.0
        %330 = vmatprep.subr.mxu0 0.0
        %331 = vmatpush1.msra.mxu0 0.0
        %332 = vmatprep.subr.mxu0 0.0
        %333 = vmatpush1.msra.mxu0 0.0
        %334 = vmatprep.subr.mxu0 0.0
        %335 = vmatpush1.msra.mxu0 0.0
        %336 = vmatprep.subr.mxu0 0.0
        %337 = vmatpush1.msra.mxu0 0.0
        %338 = vmatprep.subr.mxu0 0.0
        %339 = vmatpush1.msra.mxu0 0.0
        %340 = vmatprep.subr.mxu0 0.0
        %341 = vmatpush1.msra.mxu0 0.0
        %342 = vmatprep.subr.mxu0 0.0
        %343 = vmatpush1.msra.mxu0 0.0
        %344 = vmatprep.subr.mxu0 0.0
        %345 = vmatpush1.msra.mxu0 0.0
        %346 = vmatprep.subr.mxu0 0.0
        %347 = vmatpush1.msra.mxu0 0.0
        %348 = vmatprep.subr.mxu0 0.0
        %349 = vmatpush1.msra.mxu0 0.0
        %350 = vmatprep.subr.mxu0 0.0
        %351 = vmatpush1.msra.mxu0 0.0
        %352 = vmatprep.subr.mxu0 0.0
        %353 = vmatpush1.msra.mxu0 0.0
        %354 = vmatprep.subr.mxu0 0.0
        %355 = vmatpush1.msra.mxu0 0.0
        %356 = vmatprep.subr.mxu0 0.0
        %357 = vmatpush1.msra.mxu0 0.0
        %358 = vmatprep.subr.mxu0 0.0
        %359 = vmatpush1.msra.mxu0 0.0
        %360 = vmatprep.subr.mxu0 0.0
        %361 = vmatpush1.msra.mxu0 0.0
        %362 = vmatprep.subr.mxu0 0.0
        %363 = vmatpush1.msra.mxu0 0.0
        %364 = vmatprep.subr.mxu0 0.0
        %365 = vmatpush1.msra.mxu0 0.0
        %366 = vmatprep.mubr.f32.mxu0 0.0
        %367 = vmatmul.mubr.f32.gmra.mrb[0].mxu0 %v297
        %v368 = vpop.f32.mrb[0].mxu0
        %v369 = vadd.f32 0.0, %v368
        %v370 = vpop.f32.mrb[0].mxu0
        %371 = vmatprep.mubr.f32.mxu0 0.0
        %372 = vmatmul.mubr.f32.gmra.mrb[0].mxu0 %v300
        %v373 = vpop.f32.mrb[0].mxu0
        %v374 = vadd.f32 0.0, %v373
        %v375 = vpop.f32.mrb[0].mxu0
        %376 = vdwg.mxu0
        %v377 = vld [vmem:[#allocation2] sm:$0xff]
        %v378 = vld [vmem:[#allocation2 + $0x8] sm:$0xff]
        %v379 = vld [vmem:[%s256] sm:$0xff]
        %v380 = vld [vmem:[%s256 + $0x8] sm:$0xff]
        %v381 = vld [vmem:[%s256 + $0x10] sm:$0xff]
        %v382 = vld [vmem:[%s256 + $0x18] sm:$0xff]
        %vm383 = vcmask 261120
        %v385 = vsel %vm383, %v369, 0
        %v388 = vsel %vm383, %v374, 0
        %390 = vmatprep.subr.mxu0 0.0
        %391 = vmatpush1.msra.mxu0 %v379
        %392 = vmatprep.subr.mxu0 0.0
        %393 = vmatpush1.msra.mxu0 %v380
        %394 = vmatprep.subr.mxu0 0.0
        %395 = vmatpush1.msra.mxu0 %v381
        %396 = vmatprep.subr.mxu0 0.0
        %397 = vmatpush1.msra.mxu0 %v382
        %398 = vmatprep.subr.mxu0 0.0
        %399 = vmatpush1.msra.mxu0 0.0
        %400 = vmatprep.subr.mxu0 0.0
        %401 = vmatpush1.msra.mxu0 0.0
        %402 = vmatprep.subr.mxu0 0.0
        %403 = vmatpush1.msra.mxu0 0.0
        %404 = vmatprep.subr.mxu0 0.0
        %405 = vmatpush1.msra.mxu0 0.0
        %406 = vmatprep.subr.mxu0 0.0
        %407 = vmatpush1.msra.mxu0 0.0
        %408 = vmatprep.subr.mxu0 0.0
        %409 = vmatpush1.msra.mxu0 0.0
        %410 = vmatprep.subr.mxu0 0.0
        %411 = vmatpush1.msra.mxu0 0.0
        %412 = vmatprep.subr.mxu0 0.0
        %413 = vmatpush1.msra.mxu0 0.0
        %414 = vmatprep.subr.mxu0 0.0
        %415 = vmatpush1.msra.mxu0 0.0
        %416 = vmatprep.subr.mxu0 0.0
        %417 = vmatpush1.msra.mxu0 0.0
        %418 = vmatprep.subr.mxu0 0.0
        %419 = vmatpush1.msra.mxu0 0.0
        %420 = vmatprep.subr.mxu0 0.0
        %421 = vmatpush1.msra.mxu0 0.0
        %422 = vmatprep.subr.mxu0 0.0
        %423 = vmatpush1.msra.mxu0 0.0
        %424 = vmatprep.subr.mxu0 0.0
        %425 = vmatpush1.msra.mxu0 0.0
        %426 = vmatprep.subr.mxu0 0.0
        %427 = vmatpush1.msra.mxu0 0.0
        %428 = vmatprep.subr.mxu0 0.0
        %429 = vmatpush1.msra.mxu0 0.0
        %430 = vmatprep.subr.mxu0 0.0
        %431 = vmatpush1.msra.mxu0 0.0
        %432 = vmatprep.subr.mxu0 0.0
        %433 = vmatpush1.msra.mxu0 0.0
        %434 = vmatprep.subr.mxu0 0.0
        %435 = vmatpush1.msra.mxu0 0.0
        %436 = vmatprep.subr.mxu0 0.0
        %437 = vmatpush1.msra.mxu0 0.0
        %438 = vmatprep.subr.mxu0 0.0
        %439 = vmatpush1.msra.mxu0 0.0
        %440 = vmatprep.subr.mxu0 0.0
        %441 = vmatpush1.msra.mxu0 0.0
        %442 = vmatprep.subr.mxu0 0.0
        %443 = vmatpush1.msra.mxu0 0.0
        %444 = vmatprep.subr.mxu0 0.0
        %445 = vmatpush1.msra.mxu0 0.0
        %446 = vmatprep.subr.mxu0 0.0
        %447 = vmatpush1.msra.mxu0 0.0
        %448 = vmatprep.subr.mxu0 0.0
        %449 = vmatpush1.msra.mxu0 0.0
        %450 = vmatprep.subr.mxu0 0.0
        %451 = vmatpush1.msra.mxu0 0.0
        %452 = vmatprep.subr.mxu0 0.0
        %453 = vmatpush1.msra.mxu0 0.0
        %454 = vmatprep.mubr.f32.mxu0 0.0
        %455 = vmatmul.mubr.f32.gmra.mrb[0].mxu0 %v385
        %v456 = vpop.f32.mrb[0].mxu0
        %v457 = vadd.f32 0.0, %v456
        %v458 = vpop.f32.mrb[0].mxu0
        %459 = vmatprep.mubr.f32.mxu0 0.0
        %460 = vmatmul.mubr.f32.gmra.mrb[0].mxu0 %v388
        %v461 = vpop.f32.mrb[0].mxu0
        %v462 = vadd.f32 0.0, %v461
        %v463 = vpop.f32.mrb[0].mxu0
        %464 = vdwg.mxu0
        %v465 = vadd.f32 %v377, %v457
        %v466 = vadd.f32 %v378, %v462
        %467 = vst [vmem:[#allocation2] sm:$0xff] %v465
        %468 = vst [vmem:[#allocation2 + $0x8] sm:$0xff] %v466
        %p469 = scmp.eq.s32.totalorder %s21, 3
        // Predicated region
        $region57: #{tpu_custom_call.1} parent=39 // pred_check
          %p470 = pneg %p469
        $region58: #{tpu_custom_call.1} parent=39 // pred_check_branch
          %472 = sbr.rel (%p470) target = $region60
        $region59: #{tpu_custom_call.1} parent=39 // pred_region
          %v473 = vld [vmem:[#allocation2] sm:$0xff]
          %v474 = vld [vmem:[#allocation2 + $0x8] sm:$0xff]
          %v475 = vld [vmem:[%s3] sm:$0x1]
          %v476 = vld [vmem:[%s4] sm:$0x1]
          %v477 = vadd.f32 %v473, %v474
          %v478 = vrot.slane %v477, 4
          %v479 = vadd.f32 %v477, %v478
          %v480 = vrot.slane %v479, 2
          %v481 = vadd.f32 %v479, %v480
          %v482 = vrot.slane %v481, 1
          %v483 = vadd.f32 %v481, %v482
          %v484 = vrcp.pop 16.0
          %v485 = vmul.f32 %v483, %v484
          %v486 = vmul.f32 %v473, %v473
          %v487 = vmul.f32 %v474, %v474
          %v488 = vadd.f32 %v486, %v487
          %v489 = vrot.slane %v488, 4
          %v490 = vadd.f32 %v488, %v489
          %v491 = vrot.slane %v490, 2
          %v492 = vadd.f32 %v490, %v491
          %v493 = vrot.slane %v492, 1
          %v494 = vadd.f32 %v492, %v493
          %v495 = vmul.f32 %v494, %v484
          %v496 = vmul.f32 %v485, %v485
          %v497 = vsub.f32 %v495, %v496
          %v498 = vmax.f32 %v497, 0.0
          %v499 = vsub.f32 %v473, %v485
          %v500 = vsub.f32 %v474, %v485
          %v501 = vadd.f32 %v498, 1e-05
          %v502 = vrsqrt.pop %v501
          %v503 = vmul.f32 %v499, %v502
          %v504 = vmul.f32 %v500, %v502
          %v506 = vlaneseq
          %v507 = vshrl.u32 %v506, 7
          %v508 = vsub.s32 0, %v507
          %v509 = vrot.slane %v475, %v508
          %v511 = vmul.f32 %v503, %v509
          %v512 = vmul.f32 %v504, %v509
          %v514 = vlaneseq
          %v515 = vshrl.u32 %v514, 7
          %v516 = vsub.s32 0, %v515
          %v517 = vrot.slane %v476, %v516
          %v519 = vadd.f32 %v511, %v517
          %v520 = vadd.f32 %v512, %v517
          %vm521 = vcmp.ge.f32.partialorder %v519, 0.0
          %vm522 = vcmp.ge.f32.partialorder %v520, 0.0
          %v523 = vmul.f32 %v519, 0.2
          %v524 = vmul.f32 %v520, 0.2
          %v525 = vsel %vm521, %v519, %v523
          %v526 = vsel %vm522, %v520, %v524
          %527 = vst [vmem:[#allocation9] sm:$0xff] %v525
          %528 = vst [vmem:[#allocation9 + $0x8] sm:$0xff] %v526
        $region60: #{tpu_custom_call.1} parent=39 // pred_fallthru
          _
        // Predicated region
        $region61: #{tpu_custom_call.1} parent=39 // pred_check
          %p529 = pneg %p149
        $region62: #{tpu_custom_call.1} parent=39 // pred_check_branch
          %531 = sbr.rel (%p529) target = $region64
        $region63: #{tpu_custom_call.1} parent=39 // pred_region
          %s533 = ssub.s32 256, 256
          %534 = vsyncadd [#allocation5], %s533
          %s535 = sshll.u32 [#allocation9], 4
          %s536 = int_to_ptr.vmem [resolvable:$true] %s535
          %541 = dma.vmem_to_hbm [thread:$0]  %s536, 256, %s5, [#allocation5], 128, 128, 8
        $region64: #{tpu_custom_call.1} parent=39 // pred_fallthru
          _
        // Predicated region
        $region65: #{tpu_custom_call.1} parent=39 // pred_check
          %p542 = pneg %p149
        $region66: #{tpu_custom_call.1} parent=39 // pred_check_branch
          %544 = sbr.rel (%p542) target = $region68
        $region67: #{tpu_custom_call.1} parent=39 // pred_region
          %545 = dma.done [#allocation5], 256
        $region68: #{tpu_custom_call.1} parent=39 // pred_fallthru
          _
      $region40: #{tpu_custom_call.1} parent=5 // pred_fallthru
        _
      %p546 = scmp.le.s32.totalorder 2, %s16
      // Predicated region
      $region69: #{tpu_custom_call.1} parent=5 // pred_check
        %p547 = pneg %p546
      $region70: #{tpu_custom_call.1} parent=5 // pred_check_branch
        %549 = sbr.rel (%p547) target = $region72
      $region71: #{tpu_custom_call.1} parent=5 // pred_region
        %s550 = ssub.s32 %s16, 2
      $region72: #{tpu_custom_call.1} parent=5 // pred_fallthru
        _
    $region6: #{tpu_custom_call.1} parent=1 // loop_footer
      %s20 = sadd.s32 1, %s16
    $region7: #{tpu_custom_call.1} parent=1 // loop_footer_branch
      %15 = sbr.rel target = $region3
    $region8: #{tpu_custom_call.1} parent=1 // loop_exit
      _
    %551 = vsyncpa [#allocation4], 1
    %s552 = scalar_lea.sflag [#allocation4], 1
    %553 = vsyncpa %s552, 1
    %554 = vsyncpa [#allocation7], 1
    %555 = vsyncpa [#allocation5], 1
    %s556 = scalar_lea.sflag [#allocation5], 1
    %557 = vsyncpa %s556, 1

</llo_original>
